<compile_context>
chip_gen: v7x
topology: tpu7x:2x2x1
jax: 0.10.0
libtpu: 0.0.40
codegen_flags: <defaults>
</compile_context>

<pallas_src>
from functools import partial

import jax
import jax.numpy as jnp
from jax.experimental import pallas as pl
from jax.experimental.pallas import tpu as pltpu


def _round_up(x, m):
    return (x + m - 1) // m * m


# ----------------------------------------------------------------------------
# Fused all-heads classifier kernel
#   grid = (B_tiles, N_token_tiles)   -- token axis is the reduction axis.
#   cls_ref:   [TB, Kc]      concatenated class tokens of the last n_max blocks
#   patch_ref: [TB, TN, D]   token tile of the last block's patch tokens
#   wc_ref:    [Kc, Cp]      fused (zero-padded) weights for the cls features
#   wa_ref:    [D,  Cp]      fused weights for the avg-pooled features
#   b_ref:     [1,  Cp]      fused bias
#   o_ref:     [TB, Cp]      fused output slab (lane-dense, Cp % 128 == 0)
#   acc_ref:   [TB, D]       pooled-sum accumulator (VMEM scratch)
# ----------------------------------------------------------------------------
def _fused_heads_kernel(cls_ref, patch_ref, wc_ref, wa_ref, b_ref, o_ref,
                        acc_ref, *, inv_n_tokens):
    k = pl.program_id(1)

    @pl.when(k == 0)
    def _():
        acc_ref[...] = jnp.zeros_like(acc_ref)

    # Accumulate the pooled sum of this token tile (computed once per forward,
    # shared by every avgpool head).
    acc_ref[...] += jnp.sum(patch_ref[...], axis=1)

    @pl.when(k == pl.num_programs(1) - 1)
    def _():
        out = jnp.dot(cls_ref[...], wc_ref[...],
                      preferred_element_type=jnp.float32)
        avg = acc_ref[...] * inv_n_tokens
        out = out + jnp.dot(avg, wa_ref[...],
                            preferred_element_type=jnp.float32)
        o_ref[...] = out + b_ref[...]


def fused_classifier_forward(cls_full, patch_last, wc, wa, b_row, *,
                             token_tile=None):
    """All classifier heads in one pallas_call.

    cls_full:   [B, Kc]   f32  (concat of class tokens of last n_max blocks)
    patch_last: [B, N, D] f32
    wc:         [Kc, Cp]  f32  (Cp = padded total class count, multiple of 128)
    wa:         [D,  Cp]  f32
    b_row:      [1,  Cp]  f32
    returns     [B,  Cp]  f32
    """
    B, Kc = cls_full.shape
    _, N, D = patch_last.shape
    Cp = b_row.shape[-1]

    TB = 8  # sublane-dense batch tile
    B_pad = _round_up(B, TB)
    if B_pad != B:
        cls_full = jnp.pad(cls_full, ((0, B_pad - B), (0, 0)))
        patch_last = jnp.pad(patch_last, ((0, B_pad - B), (0, 0), (0, 0)))

    # Token tile: a multiple of 8 dividing N (or N itself), capped so the
    # double-buffered tile stays small even at real DINOv2 sizes.
    if token_tile is None:
        token_tile = N
        for t in range(min(N, 512), 0, -1):
            if N % t == 0 and (t % 8 == 0 or t == N):
                token_tile = t
                break
    assert N % token_tile == 0, (N, token_tile)
    n_tiles = N // token_tile

    grid = (B_pad // TB, n_tiles)

    out = pl.pallas_call(
        partial(_fused_heads_kernel, inv_n_tokens=1.0 / N),
        out_shape=jax.ShapeDtypeStruct((B_pad, Cp), jnp.float32),
        grid_spec=pltpu.PrefetchScalarGridSpec(
            num_scalar_prefetch=0,
            grid=grid,
            in_specs=[
                pl.BlockSpec((TB, Kc), lambda i, k: (i, 0)),
                pl.BlockSpec((TB, token_tile, D), lambda i, k: (i, k, 0)),
                pl.BlockSpec((Kc, Cp), lambda i, k: (0, 0)),
                pl.BlockSpec((D, Cp), lambda i, k: (0, 0)),
                pl.BlockSpec((1, Cp), lambda i, k: (0, 0)),
            ],
            out_specs=pl.BlockSpec((TB, Cp), lambda i, k: (i, 0)),
            scratch_shapes=[pltpu.VMEM((TB, D), jnp.float32)],
        ),
        compiler_params=pltpu.CompilerParams(
            dimension_semantics=("parallel", "arbitrary")),
    )(cls_full, patch_last, wc, wa, b_row)
    return out[:B]


# ----------------------------------------------------------------------------
# Glue: create_linear_input / scale_lr  (plain JAX / Python, matches PyTorch)
# ----------------------------------------------------------------------------
def create_linear_input_cls(x_tokens_list, use_n_blocks):
    """Concat of the class tokens of the last `use_n_blocks` blocks."""
    intermediate = x_tokens_list[-use_n_blocks:]
    return jnp.concatenate([cls for _, cls in intermediate], axis=-1).astype(jnp.float32)


def scale_lr(lr, batch_size):
    return lr * batch_size / 256.0


# ----------------------------------------------------------------------------
# Synthetic feature model (stand-in for the torch.hub DINOv2 backbone)
# ----------------------------------------------------------------------------
def init_feature_model(key, in_chans, patch_size, embed_dim, n_blocks):
    kp, kc, kb = jax.random.split(key, 3)
    patch_dim = in_chans * patch_size * patch_size
    params = {
        "patch_proj": 0.02 * jax.random.normal(kp, (patch_dim, embed_dim), jnp.float32),
        "cls_token": 0.02 * jax.random.normal(kc, (1, embed_dim), jnp.float32),
        "block_w": 0.1 * jax.random.normal(kb, (n_blocks, embed_dim, embed_dim), jnp.float32)
                   + jnp.eye(embed_dim)[None, :, :],
    }
    return params


def feature_model_forward(params, images, n_last_blocks, patch_size):
    """Returns list (len n_last_blocks) of (patch_tokens [B,N,D], class_token [B,D])."""
    B, C, H, W = images.shape
    P = patch_size
    x = images.reshape(B, C, H // P, P, W // P, P)
    x = jnp.transpose(x, (0, 2, 4, 1, 3, 5)).reshape(B, (H // P) * (W // P), C * P * P)
    tokens = x @ params["patch_proj"]                       # [B, N, D]
    cls = jnp.tile(params["cls_token"], (B, 1))             # [B, D]
    feats = []
    for i in range(n_last_blocks):
        tokens = jnp.tanh(tokens @ params["block_w"][i])
        cls = jnp.tanh(cls @ params["block_w"][i])
        feats.append((tokens, cls))
    return feats


# ----------------------------------------------------------------------------
# Create_DINO equivalent
# ----------------------------------------------------------------------------
class CreateDINOPallas:
    def __init__(self, key, sample, batch_size, concat, num_classes,
                 lr_list, n_last_blocks_list, avg_pool_list,
                 embed_dim=32, patch_size=4, token_tile=None):
        # TODO(synk): concat=True (dual image stream) variant not implemented.
        assert not concat, "concat=False variant implemented (single image stream)"
        self.n_last_blocks_list = n_last_blocks_list
        self.avg_pool_list = avg_pool_list
        self.learning_rates = lr_list
        self.num_classes = num_classes
        self.embed_dim = embed_dim
        self.patch_size = patch_size
        self.token_tile = token_tile
        self.n_last_blocks = max(n_last_blocks_list)

        k_feat, k_cls = jax.random.split(key)
        in_chans = sample.shape[1]
        self.feature_params = init_feature_model(
            k_feat, in_chans, patch_size, embed_dim, self.n_last_blocks)

        # setup_linear_classifiers (out_dim derived from sample_output, like PyTorch)
        sample_output = feature_model_forward(
            self.feature_params, sample, self.n_last_blocks, patch_size)

        D = embed_dim
        Kc = self.n_last_blocks * D
        C = num_classes

        # Per-head params (kept for the plain-JAX reference) in insertion order.
        self.per_head_params = {}
        for n in n_last_blocks_list:
            for avgpool in avg_pool_list:
                for _lr in lr_list:
                    lr = scale_lr(_lr, batch_size)
                    cls_cat = create_linear_input_cls(sample_output, n)
                    out_dim = cls_cat.shape[1] + (D if avgpool else 0)
                    name = f"classifier_{n}_blocks_avgpool_{avgpool}_lr_{lr:.5f}".replace(".", "_")
                    k_cls, kw = jax.random.split(k_cls)
                    # nn.Linear init: weight ~ N(0, 0.01), bias = 0; stored transposed.
                    W = 0.01 * jax.random.normal(kw, (out_dim, C), jnp.float32)
                    b = jnp.zeros((C,), jnp.float32)
                    self.per_head_params[name] = dict(W=W, b=b, n=n, avgpool=avgpool)
        self.head_names = list(self.per_head_params.keys())

        # Fuse all heads: zero-pad each W into the shared [Kc (+D)] feature
        # layout and concatenate along the class axis, padded to 128 lanes.
        n_heads = len(self.head_names)
        C_total = n_heads * C
        C_pad = _round_up(C_total, 128)
        wc = jnp.zeros((Kc, C_pad), jnp.float32)
        wa = jnp.zeros((D, C_pad), jnp.float32)
        b_all = jnp.zeros((1, C_pad), jnp.float32)
        for h, name in enumerate(self.head_names):
            cfg = self.per_head_params[name]
            n, avgpool, W, b = cfg["n"], cfg["avgpool"], cfg["W"], cfg["b"]
            col = h * C
            # cls features of a head with n blocks are the LAST n*D columns of
            # the full cls concat.
            wc = wc.at[(self.n_last_blocks - n) * D:Kc, col:col + C].set(W[:n * D])
            if avgpool:
                wa = wa.at[:, col:col + C].set(W[n * D:])
            b_all = b_all.at[0, col:col + C].set(b)
        self.wc, self.wa, self.b_all = wc, wa, b_all

        # One jitted program: backbone glue + fused kernel + head splitting.
        self._jit_forward = jax.jit(self._forward_impl)

    # ---- jitted implementation -------------------------------------------
    def _forward_impl(self, feat_params, wc, wa, b_all, images):
        features = feature_model_forward(
            feat_params, images, self.n_last_blocks, self.patch_size)
        patch_last = features[-1][0]                                  # [B, N, D]
        cls_full = jnp.concatenate([c for _, c in features], axis=-1)  # [B, Kc]
        out_all = fused_classifier_forward(
            cls_full, patch_last, wc, wa, b_all, token_tile=self.token_tile)
        C = self.num_classes
        return {name: out_all[:, h * C:(h + 1) * C]
                for h, name in enumerate(self.head_names)}

    def forward(self, images):
        return self._jit_forward(
            self.feature_params, self.wc, self.wa, self.b_all, images)

    # ---- plain-JAX reference for sanity checking --------------------------
    def forward_ref(self, images):
        features = feature_model_forward(
            self.feature_params, images, self.n_last_blocks, self.patch_size)
        patch_last = features[-1][0]
        outputs = {}
        for name, c in self.per_head_params.items():
            x = create_linear_input_cls(features, c["n"])
            if c["avgpool"]:
                x = jnp.concatenate([x, jnp.mean(patch_last, axis=1)], axis=-1)
            outputs[name] = x @ c["W"] + c["b"]
        return outputs


if __name__ == "__main__":
    key = jax.random.PRNGKey(0)
    B, C, H, W = 2, 3, 16, 16
    images = jax.random.normal(jax.random.fold_in(key, 1), (B, C, H, W), jnp.float32)

    model = CreateDINOPallas(
        key=key,
        sample=images,
        batch_size=B,
        concat=False,
        num_classes=16,
        lr_list=[1e-3, 1e-2],
        n_last_blocks_list=[1, 4],
        avg_pool_list=[False, True],
        embed_dim=32,
        patch_size=4,
        token_tile=8,   # 16 tokens -> 2 reduction steps (exercises the accumulator)
    )

    outputs = model.forward(images)
    refs = model.forward_ref(images)

    for name in model.head_names:
        out = jax.block_until_ready(outputs[name])
        assert out.shape == (B, 16), (name, out.shape)
        assert jnp.allclose(out, refs[name], atol=1e-4, rtol=1e-4), name

    print("KERNEL_OK")
</pallas_src>

<mosaic_0001>
module attributes {stable_mosaic.version = 11 : i64} {
  func.func @_fused_heads_kernel(%arg0: i32, %arg1: i32, %arg2: memref<8x128xf32, #tpu.memory_space<vmem>>, %arg3: memref<8x8x32xf32, #tpu.memory_space<vmem>>, %arg4: memref<128x128xf32, #tpu.memory_space<vmem>>, %arg5: memref<32x128xf32, #tpu.memory_space<vmem>>, %arg6: memref<1x128xf32, #tpu.memory_space<vmem>>, %arg7: memref<8x128xf32, #tpu.memory_space<vmem>>, %arg8: memref<8x32xf32, #tpu.memory_space<vmem>>) attributes {dimension_semantics = [#tpu.dimension_semantics<parallel>, #tpu.dimension_semantics<arbitrary>], iteration_bounds = array<i64: 1, 2>, scalar_prefetch = 0 : i64, scratch_operands = 1 : i64, tpu.core_type = #tpu.core_type<tc>, window_params = [{transform_indices = @transform_0, window_bounds = array<i64: 8, 128>}, {transform_indices = @transform_1, window_bounds = array<i64: 8, 8, 32>}, {pipeline_mode = #tpu.pipeline_mode<synchronous>, transform_indices = @transform_2, window_bounds = array<i64: 128, 128>}, {pipeline_mode = #tpu.pipeline_mode<synchronous>, transform_indices = @transform_3, window_bounds = array<i64: 32, 128>}, {pipeline_mode = #tpu.pipeline_mode<synchronous>, transform_indices = @transform_4, window_bounds = array<i64: 1, 128>}, {transform_indices = @transform_5, window_bounds = array<i64: 8, 128>}]} {
    %c0_i32 = arith.constant 0 : i32
    %0 = arith.cmpi eq, %arg1, %c0_i32 : i32
    %1 = arith.extui %0 : i1 to i32
    %c0_i32_0 = arith.constant 0 : i32
    %2 = arith.cmpi ne, %1, %c0_i32_0 : i32
    scf.if %2 {
      %cst_8 = arith.constant 0.000000e+00 : f32
      %11 = vector.broadcast %cst_8 : f32 to vector<8x32xf32>
      %c0_9 = arith.constant 0 : index
      %c0_10 = arith.constant 0 : index
      %12 = vector.load %arg8[%c0_9, %c0_10] : memref<8x32xf32, #tpu.memory_space<vmem>>, vector<8x32xf32>
      tpu.vector_store %arg8[%c0_9, %c0_10], %11 {strides = array<i32>} : memref<8x32xf32, #tpu.memory_space<vmem>>, vector<8x32xf32>,
    } else {
    }
    %c0 = arith.constant 0 : index
    %c0_1 = arith.constant 0 : index
    %3 = vector.load %arg8[%c0, %c0_1] : memref<8x32xf32, #tpu.memory_space<vmem>>, vector<8x32xf32>
    %c0_2 = arith.constant 0 : index
    %c0_3 = arith.constant 0 : index
    %c0_4 = arith.constant 0 : index
    %4 = vector.load %arg3[%c0_2, %c0_3, %c0_4] : memref<8x8x32xf32, #tpu.memory_space<vmem>>, vector<8x8x32xf32>
    %cst = arith.constant dense<0.000000e+00> : vector<8x32xf32>
    %5 = vector.multi_reduction <add>, %4, %cst [1] : vector<8x8x32xf32> to vector<8x32xf32>
    %6 = arith.addf %3, %5 : vector<8x32xf32>
    %c0_5 = arith.constant 0 : index
    %c0_6 = arith.constant 0 : index
    %7 = vector.load %arg8[%c0_5, %c0_6] : memref<8x32xf32, #tpu.memory_space<vmem>>, vector<8x32xf32>
    tpu.vector_store %arg8[%c0_5, %c0_6], %6 {strides = array<i32>} : memref<8x32xf32, #tpu.memory_space<vmem>>, vector<8x32xf32>,
    %c1_i32 = arith.constant 1 : i32
    %8 = arith.cmpi eq, %arg1, %c1_i32 : i32
    %9 = arith.extui %8 : i1 to i32
    %c0_i32_7 = arith.constant 0 : i32
    %10 = arith.cmpi ne, %9, %c0_i32_7 : i32
    scf.if %10 {
      %c0_8 = arith.constant 0 : index
      %c0_9 = arith.constant 0 : index
      %11 = vector.load %arg2[%c0_8, %c0_9] : memref<8x128xf32, #tpu.memory_space<vmem>>, vector<8x128xf32>
      %c0_10 = arith.constant 0 : index
      %c0_11 = arith.constant 0 : index
      %12 = vector.load %arg4[%c0_10, %c0_11] : memref<128x128xf32, #tpu.memory_space<vmem>>, vector<128x128xf32>
      %cst_12 = arith.constant dense<0.000000e+00> : vector<8x128xf32>
      %13 = tpu.matmul %11, %12, %cst_12 {dimension_numbers = #tpu.dot_dimension_numbers<[1], [0], [0], [1], [0, 0, 1, 1], [], []>} : vector<8x128xf32>, vector<128x128xf32>, vector<8x128xf32> -> vector<8x128xf32>
      %c0_13 = arith.constant 0 : index
      %c0_14 = arith.constant 0 : index
      %14 = vector.load %arg8[%c0_13, %c0_14] : memref<8x32xf32, #tpu.memory_space<vmem>>, vector<8x32xf32>
      %cst_15 = arith.constant 6.250000e-02 : f32
      %15 = vector.broadcast %cst_15 : f32 to vector<8x32xf32>
      %16 = arith.mulf %14, %15 : vector<8x32xf32>
      %c0_16 = arith.constant 0 : index
      %c0_17 = arith.constant 0 : index
      %17 = vector.load %arg5[%c0_16, %c0_17] : memref<32x128xf32, #tpu.memory_space<vmem>>, vector<32x128xf32>
      %cst_18 = arith.constant dense<0.000000e+00> : vector<8x128xf32>
      %18 = tpu.matmul %16, %17, %cst_18 {dimension_numbers = #tpu.dot_dimension_numbers<[1], [0], [0], [1], [0, 0, 1, 1], [], []>} : vector<8x32xf32>, vector<32x128xf32>, vector<8x128xf32> -> vector<8x128xf32>
      %19 = arith.addf %13, %18 : vector<8x128xf32>
      %c0_19 = arith.constant 0 : index
      %c0_20 = arith.constant 0 : index
      %20 = vector.load %arg6[%c0_19, %c0_20] : memref<1x128xf32, #tpu.memory_space<vmem>>, vector<1x128xf32>
      %21 = vector.broadcast %20 : vector<1x128xf32> to vector<8x128xf32>
      %22 = arith.addf %19, %21 : vector<8x128xf32>
      %c0_21 = arith.constant 0 : index
      %c0_22 = arith.constant 0 : index
      %23 = vector.load %arg7[%c0_21, %c0_22] : memref<8x128xf32, #tpu.memory_space<vmem>>, vector<8x128xf32>
      tpu.vector_store %arg7[%c0_21, %c0_22], %22 {strides = array<i32>} : memref<8x128xf32, #tpu.memory_space<vmem>>, vector<8x128xf32>,
    } else {
    }
    return
  }
  func.func @transform_0(%arg0: i32, %arg1: i32) -> (i32, i32) {
    %c0_i32 = arith.constant 0 : i32
    %c0_i32_0 = arith.constant 0 : i32
    return %arg0, %c0_i32 : i32, i32
  }
  func.func @transform_1(%arg0: i32, %arg1: i32) -> (i32, i32, i32) {
    %c0_i32 = arith.constant 0 : i32
    %c0_i32_0 = arith.constant 0 : i32
    return %arg0, %arg1, %c0_i32 : i32, i32, i32
  }
  func.func @transform_2(%arg0: i32, %arg1: i32) -> (i32, i32) {
    %c0_i32 = arith.constant 0 : i32
    %c0_i32_0 = arith.constant 0 : i32
    %c0_i32_1 = arith.constant 0 : i32
    return %c0_i32, %c0_i32_0 : i32, i32
  }
  func.func @transform_3(%arg0: i32, %arg1: i32) -> (i32, i32) {
    %c0_i32 = arith.constant 0 : i32
    %c0_i32_0 = arith.constant 0 : i32
    %c0_i32_1 = arith.constant 0 : i32
    return %c0_i32, %c0_i32_0 : i32, i32
  }
  func.func @transform_4(%arg0: i32, %arg1: i32) -> (i32, i32) {
    %c0_i32 = arith.constant 0 : i32
    %c0_i32_0 = arith.constant 0 : i32
    %c0_i32_1 = arith.constant 0 : i32
    return %c0_i32, %c0_i32_0 : i32, i32
  }
  func.func @transform_5(%arg0: i32, %arg1: i32) -> (i32, i32) {
    %c0_i32 = arith.constant 0 : i32
    %c0_i32_0 = arith.constant 0 : i32
    return %arg0, %c0_i32 : i32, i32
  }
}

</mosaic_0001>

<llo_original>
// kernel: _forward_impl.1
$region0: #{_forward_impl.1}
  #allocation0 [shape = 'u32[]', space=smem, size = 0x4, offset = 0x4, fixed_abs, tag = 'smem constant byte address 0x4 - core index']
  #allocation1 [shape = 'u32[144,128]{1,0:T(1,128)}', space=vmem, size = 0x12000, scoped, tag = 'internal scratch']
  #allocation2 [shape = 'f32[8,32]{1,0:T(8,128)}', space=vmem, size = 0x1000, scoped, tag = 'scratch operand']
  %s0 = inlined_call_operand.vmem [shape: f32[8,128], index: 0, kind: input, shape index: {}]
  %s1 = inlined_call_operand.vmem [shape: f32[8,16,32], index: 1, kind: input, shape index: {}]
  %s2 = inlined_call_operand.vmem [shape: f32[128,128], index: 2, kind: input, shape index: {}]
  %s3 = inlined_call_operand.vmem [shape: f32[32,128], index: 3, kind: input, shape index: {}]
  %s4 = inlined_call_operand.vmem [shape: f32[1,128], index: 4, kind: input, shape index: {}]
  %s5 = inlined_call_operand.vmem [shape: f32[8,128], index: 5, kind: output, shape index: {}]
  %s6 = sld [smem:[#allocation0]]
  $region99: #{_forward_impl.1} parent=0
    _
  %s8 = ssub.s32 1, %s6
  %s9 = scalar_select 0, %s8, %s6
  $region1: #{_forward_impl.1} parent=0
    #allocation3 [shape = 'u8[65536]{0}', space=vmem, size = 0x10000, scoped, tag = 'input window, operand 1']
    loop: start=0, step=1, limit=4
    $region2: #{_forward_impl.1} parent=1 // loop_pre_header
      _
    $region3: #{_forward_impl.1} parent=1 // loop_header
      %s11 = sphi 0, %s15
      %p12 = scmp.ge.s32.totalorder %s11, 4
      %s18 = sphi 0, %s30
      %s19 = sphi 0, %s26
      %s20 = sphi 0, %s18
      %s21 = sphi 0, %s19
      %s22 = sphi 0, %s20
      %s23 = sphi 0, %s21
      %s33 = sphi 0, %s35
      %s36 = sphi 0, %s33
      %s37 = sphi 0, %s36
      %s53 = sphi 0, %s37
      %s61 = sphi 0, %s63
      %s64 = sphi 0, %s61
      %s65 = sphi 0, %s64
      %s81 = sphi 0, %s65
      %s85 = sphi 0, %s85
      %s87 = sphi 0, %s85
      %s88 = sphi 0, %s87
      %s102 = sphi 0, %s88
      %s106 = sphi 0, %s106
      %s108 = sphi 0, %s106
      %s109 = sphi 0, %s108
      %s123 = sphi 0, %s109
      %s127 = sphi 0, %s127
      %s129 = sphi 0, %s127
      %s130 = sphi 0, %s129
      %s144 = sphi 0, %s130
      %s150 = sphi 0, %s152
      %s153 = sphi 0, %s150
      %s154 = sphi 0, %s153
      %s170 = sphi 0, %s154
    $region4: #{_forward_impl.1} parent=1 // loop_header_branch
      %14 = sbr.rel (%p12) target = $region8
    $region5: #{_forward_impl.1} parent=1 // loop_body
      %s16 = ssub.s32 %s11, 1
      %s17 = ssub.s32 %s11, 2
      %s24 = sadd.s32 1, %s19
      %p25 = scmp.ge.s32.totalorder %s24, 2
      %s26 = scalar_select %p25, 0, %s24
      %s27 = sadd.s32 1, %s18
      %s28 = scalar_select %p25, %s27, %s18
      %p29 = scmp.ge.s32.totalorder %s28, 1
      %s30 = scalar_select %p29, 0, %s28
      %s31 = ssub.s32 %s18, %s30
      %p32 = scmp.eq.s32.totalorder %s31, 0
      %s34 = sadd.s32 %s33, 1
      %s35 = scalar_select %p32, %s33, %s34
      %p38 = pneg %p32
      %p39 = scmp.eq.s32.totalorder %s11, 1
      %p40 = por %p38, %p39
      %p41 = scmp.ne.s32.totalorder %s33, %s36
      %p42 = scmp.eq.s32.totalorder %s11, 0
      %p43 = por %p41, %p42
      %p44 = scmp.ne.s32.totalorder %s33, %s36
      %p45 = scmp.eq.s32.totalorder %s16, 1
      %p46 = por %p44, %p45
      %p47 = scmp.ne.s32.totalorder %s36, %s37
      %p48 = scmp.eq.s32.totalorder %s16, 0
      %p49 = por %p47, %p48
      %p50 = scmp.ne.s32.totalorder %s36, %s37
      %p51 = scmp.eq.s32.totalorder %s17, 1
      %p52 = por %p50, %p51
      %p54 = scmp.ne.s32.totalorder %s37, %s53
      %p55 = scmp.eq.s32.totalorder %s17, 0
      %p56 = por %p54, %p55
      %s57 = ssub.s32 %s18, %s30
      %s58 = ssub.s32 %s19, %s26
      %s59 = sor.u32 %s57, %s58
      %p60 = scmp.eq.s32.totalorder %s59, 0
      %s62 = sadd.s32 %s61, 1
      %s63 = scalar_select %p60, %s61, %s62
      %p66 = pneg %p60
      %p67 = scmp.eq.s32.totalorder %s11, 1
      %p68 = por %p66, %p67
      %p69 = scmp.ne.s32.totalorder %s61, %s64
      %p70 = scmp.eq.s32.totalorder %s11, 0
      %p71 = por %p69, %p70
      %p72 = scmp.ne.s32.totalorder %s61, %s64
      %p73 = scmp.eq.s32.totalorder %s16, 1
      %p74 = por %p72, %p73
      %p75 = scmp.ne.s32.totalorder %s64, %s65
      %p76 = scmp.eq.s32.totalorder %s16, 0
      %p77 = por %p75, %p76
      %p78 = scmp.ne.s32.totalorder %s64, %s65
      %p79 = scmp.eq.s32.totalorder %s17, 1
      %p80 = por %p78, %p79
      %p82 = scmp.ne.s32.totalorder %s65, %s81
      %p83 = scmp.eq.s32.totalorder %s17, 0
      %p84 = por %p82, %p83
      %s86 = sadd.s32 %s85, 1
      %p89 = scmp.eq.s32.totalorder %s11, 1
      %p90 = scmp.ne.s32.totalorder %s85, %s87
      %p91 = scmp.eq.s32.totalorder %s11, 0
      %p92 = por %p90, %p91
      %p93 = scmp.ne.s32.totalorder %s85, %s87
      %p94 = scmp.eq.s32.totalorder %s16, 1
      %p95 = por %p93, %p94
      %p96 = scmp.ne.s32.totalorder %s87, %s88
      %p97 = scmp.eq.s32.totalorder %s16, 0
      %p98 = por %p96, %p97
      %p99 = scmp.ne.s32.totalorder %s87, %s88
      %p100 = scmp.eq.s32.totalorder %s17, 1
      %p101 = por %p99, %p100
      %p103 = scmp.ne.s32.totalorder %s88, %s102
      %p104 = scmp.eq.s32.totalorder %s17, 0
      %p105 = por %p103, %p104
      %s107 = sadd.s32 %s106, 1
      %p110 = scmp.eq.s32.totalorder %s11, 1
      %p111 = scmp.ne.s32.totalorder %s106, %s108
      %p112 = scmp.eq.s32.totalorder %s11, 0
      %p113 = por %p111, %p112
      %p114 = scmp.ne.s32.totalorder %s106, %s108
      %p115 = scmp.eq.s32.totalorder %s16, 1
      %p116 = por %p114, %p115
      %p117 = scmp.ne.s32.totalorder %s108, %s109
      %p118 = scmp.eq.s32.totalorder %s16, 0
      %p119 = por %p117, %p118
      %p120 = scmp.ne.s32.totalorder %s108, %s109
      %p121 = scmp.eq.s32.totalorder %s17, 1
      %p122 = por %p120, %p121
      %p124 = scmp.ne.s32.totalorder %s109, %s123
      %p125 = scmp.eq.s32.totalorder %s17, 0
      %p126 = por %p124, %p125
      %s128 = sadd.s32 %s127, 1
      %p131 = scmp.eq.s32.totalorder %s11, 1
      %p132 = scmp.ne.s32.totalorder %s127, %s129
      %p133 = scmp.eq.s32.totalorder %s11, 0
      %p134 = por %p132, %p133
      %p135 = scmp.ne.s32.totalorder %s127, %s129
      %p136 = scmp.eq.s32.totalorder %s16, 1
      %p137 = por %p135, %p136
      %p138 = scmp.ne.s32.totalorder %s129, %s130
      %p139 = scmp.eq.s32.totalorder %s16, 0
      %p140 = por %p138, %p139
      %p141 = scmp.ne.s32.totalorder %s129, %s130
      %p142 = scmp.eq.s32.totalorder %s17, 1
      %p143 = por %p141, %p142
      %p145 = scmp.ne.s32.totalorder %s130, %s144
      %p146 = scmp.eq.s32.totalorder %s17, 0
      %p147 = por %p145, %p146
      %s148 = ssub.s32 %s18, %s30
      %p149 = scmp.eq.s32.totalorder %s148, 0
      %s151 = sadd.s32 %s150, 1
      %s152 = scalar_select %p149, %s150, %s151
      %p155 = pneg %p149
      %p156 = scmp.eq.s32.totalorder %s11, 1
      %p157 = por %p155, %p156
      %p158 = scmp.ne.s32.totalorder %s150, %s153
      %p159 = scmp.eq.s32.totalorder %s11, 0
      %p160 = por %p158, %p159
      %p161 = scmp.ne.s32.totalorder %s150, %s153
      %p162 = scmp.eq.s32.totalorder %s16, 1
      %p163 = por %p161, %p162
      %p164 = scmp.ne.s32.totalorder %s153, %s154
      %p165 = scmp.eq.s32.totalorder %s16, 0
      %p166 = por %p164, %p165
      %p167 = scmp.ne.s32.totalorder %s153, %s154
      %p168 = scmp.eq.s32.totalorder %s17, 1
      %p169 = por %p167, %p168
      %p171 = scmp.ne.s32.totalorder %s154, %s170
      %p172 = scmp.eq.s32.totalorder %s17, 0
      %p173 = por %p171, %p172
      %p174 = scmp.le.s32.totalorder 1, %s11
      %p175 = scmp.lt.s32.totalorder %s11, 3
      %p176 = pnand %p174, %p175
      %p177 = pneg %p176
      // Predicated region
      $region9: #{_forward_impl.1} parent=5 // pred_check
        _
      $region10: #{_forward_impl.1} parent=5 // pred_check_branch
        %179 = sbr.rel (%p176) target = $region12
      $region11: #{_forward_impl.1} parent=5 // pred_region
        %s180 = ssub.s32 %s11, 1
        // Predicated region
        $region13: #{_forward_impl.1} parent=11 // pred_check
          %p181 = pneg %p49
        $region14: #{_forward_impl.1} parent=11 // pred_check_branch
          %183 = sbr.rel (%p181) target = $region16
        $region15: #{_forward_impl.1} parent=11 // pred_region
          %p184 = scmp.lt.s32.totalorder %s20, 0
          %s185 = scalar_select %p184, %s20, 0
          %s186 = smul.addr %s185, 8
          %s187 = scalar_lea.vmem %s0, %s186
        $region16: #{_forward_impl.1} parent=11 // pred_fallthru
          _
        // Predicated region
        $region17: #{_forward_impl.1} parent=11 // pred_check
          %p188 = pneg %p98
        $region18: #{_forward_impl.1} parent=11 // pred_check_branch
          %190 = sbr.rel (%p188) target = $region20
        $region19: #{_forward_impl.1} parent=11 // pred_region
          _
        $region20: #{_forward_impl.1} parent=11 // pred_fallthru
          _
        // Predicated region
        $region21: #{_forward_impl.1} parent=11 // pred_check
          %p191 = pneg %p119
        $region22: #{_forward_impl.1} parent=11 // pred_check_branch
          %193 = sbr.rel (%p191) target = $region24
        $region23: #{_forward_impl.1} parent=11 // pred_region
          _
        $region24: #{_forward_impl.1} parent=11 // pred_fallthru
          _
        // Predicated region
        $region25: #{_forward_impl.1} parent=11 // pred_check
          %p194 = pneg %p140
        $region26: #{_forward_impl.1} parent=11 // pred_check_branch
          %196 = sbr.rel (%p194) target = $region28
        $region27: #{_forward_impl.1} parent=11 // pred_region
          _
        $region28: #{_forward_impl.1} parent=11 // pred_fallthru
          _
      $region12: #{_forward_impl.1} parent=5 // pred_fallthru
        _
      %p197 = scmp.lt.s32.totalorder %s11, 2
      // Predicated region
      $region29: #{_forward_impl.1} parent=5 // pred_check
        %p198 = pneg %p197
      $region30: #{_forward_impl.1} parent=5 // pred_check_branch
        %200 = sbr.rel (%p198) target = $region32
      $region31: #{_forward_impl.1} parent=5 // pred_region
        // Predicated region
        $region33: #{_forward_impl.1} parent=31 // pred_check
          %p201 = pneg %p71
        $region34: #{_forward_impl.1} parent=31 // pred_check_branch
          %203 = sbr.rel (%p201) target = $region36
        $region35: #{_forward_impl.1} parent=31 // pred_region
          %s204 = sand.u32 %s61, 1
          %s205 = sand.u32 %s61, 1
          %s206 = smul.addr %s205, 64
          %s207 = scalar_lea.vmem [#allocation3], %s206
          %s208 = smul.u32 8, %s18
          %s209 = smul.addr %s208, 2
          %s210 = sadd.s32 %s19, %s209
          %s211 = smul.addr %s210, 8
          %s212 = scalar_lea.vmem %s1, %s211
          // Predicated region
          $region37: #{_forward_impl.1} parent=35 // pred_check
            _
          $region38: #{_forward_impl.1} parent=35 // pred_check_branch
            %214 = sbr.rel (0) target = $region40
          $region39: #{_forward_impl.1} parent=35 // pred_region
            // Predicated region
            $region41: #{_forward_impl.1} parent=39 // pred_check
              _
            $region42: #{_forward_impl.1} parent=39 // pred_check_branch
              %216 = sbr.rel (0) target = $region44
            $region43: #{_forward_impl.1} parent=39 // pred_region
              // Predicated region
              $region56: #{_forward_impl.1} parent=43 // pred_check
                _
              $region57: #{_forward_impl.1} parent=43 // pred_check_branch
                %245 = sbr.rel (0) target = $region59
              $region58: #{_forward_impl.1} parent=43 // pred_region
                loop: start=0, step=1, limit=1
                $region60: #{_forward_impl.1} parent=58 // loop_pre_header
                  _
                $region61: #{_forward_impl.1} parent=58 // loop_header
                  %s247 = sphi 0, %s251
                  %p248 = scmp.ge.s32.totalorder %s247, 1
                  %s252 = sphi %s212, %s212
                  %s253 = sphi %s207, %s207
                $region62: #{_forward_impl.1} parent=58 // loop_header_branch
                  %250 = sbr.rel (%p248) target = $region66
                $region63: #{_forward_impl.1} parent=58 // loop_body
                  %v254 = vld [vmem:[%s252] sm:$0xff]
                  %255 = vst [vmem:[%s253] sm:$0xff] %v254
                  %v256 = vld [vmem:[%s252 + $0x10] sm:$0xff]
                  %257 = vst [vmem:[%s253 + $0x8] sm:$0xff] %v256
                  %v258 = vld [vmem:[%s252 + $0x20] sm:$0xff]
                  %259 = vst [vmem:[%s253 + $0x10] sm:$0xff] %v258
                  %v260 = vld [vmem:[%s252 + $0x30] sm:$0xff]
                  %261 = vst [vmem:[%s253 + $0x18] sm:$0xff] %v260
                  %v262 = vld [vmem:[%s252 + $0x40] sm:$0xff]
                  %263 = vst [vmem:[%s253 + $0x20] sm:$0xff] %v262
                  %v264 = vld [vmem:[%s252 + $0x50] sm:$0xff]
                  %265 = vst [vmem:[%s253 + $0x28] sm:$0xff] %v264
                  %v266 = vld [vmem:[%s252 + $0x60] sm:$0xff]
                  %267 = vst [vmem:[%s253 + $0x30] sm:$0xff] %v266
                  %v268 = vld [vmem:[%s252 + $0x70] sm:$0xff]
                  %269 = vst [vmem:[%s253 + $0x38] sm:$0xff] %v268
                $region64: #{_forward_impl.1} parent=58 // loop_footer
                  %s251 = sadd.s32 1, %s247
                $region65: #{_forward_impl.1} parent=58 // loop_footer_branch
                  %246 = sbr.rel target = $region61
                $region66: #{_forward_impl.1} parent=58 // loop_exit
                  _
              $region59: #{_forward_impl.1} parent=43 // pred_fallthru
                _
              // Predicated region
              $region67: #{_forward_impl.1} parent=43 // pred_check
                _
              $region68: #{_forward_impl.1} parent=43 // pred_check_branch
                %271 = sbr.rel target = $region70
              $region69: #{_forward_impl.1} parent=43 // pred_region
                _
              $region70: #{_forward_impl.1} parent=43 // pred_fallthru
                _
            $region44: #{_forward_impl.1} parent=39 // pred_fallthru
              _
            // Predicated region
            $region45: #{_forward_impl.1} parent=39 // pred_check
              _
            $region46: #{_forward_impl.1} parent=39 // pred_check_branch
              %218 = sbr.rel target = $region48
            $region47: #{_forward_impl.1} parent=39 // pred_region
              loop: start=0, step=1, limit=1
              $region49: #{_forward_impl.1} parent=47 // loop_pre_header
                _
              $region50: #{_forward_impl.1} parent=47 // loop_header
                %s221 = sphi 0, %s225
                %p222 = scmp.ge.s32.totalorder %s221, 1
                %s226 = sphi %s212, %s212
                %s227 = sphi %s207, %s207
              $region51: #{_forward_impl.1} parent=47 // loop_header_branch
                %224 = sbr.rel (%p222) target = $region55
              $region52: #{_forward_impl.1} parent=47 // loop_body
                %v228 = vld [vmem:[%s226] sm:$0xff]
                %229 = vst [vmem:[%s227] sm:$0xff] %v228
                %v230 = vld [vmem:[%s226 + $0x10] sm:$0xff]
                %231 = vst [vmem:[%s227 + $0x8] sm:$0xff] %v230
                %v232 = vld [vmem:[%s226 + $0x20] sm:$0xff]
                %233 = vst [vmem:[%s227 + $0x10] sm:$0xff] %v232
                %v234 = vld [vmem:[%s226 + $0x30] sm:$0xff]
                %235 = vst [vmem:[%s227 + $0x18] sm:$0xff] %v234
                %v236 = vld [vmem:[%s226 + $0x40] sm:$0xff]
                %237 = vst [vmem:[%s227 + $0x20] sm:$0xff] %v236
                %v238 = vld [vmem:[%s226 + $0x50] sm:$0xff]
                %239 = vst [vmem:[%s227 + $0x28] sm:$0xff] %v238
                %v240 = vld [vmem:[%s226 + $0x60] sm:$0xff]
                %241 = vst [vmem:[%s227 + $0x30] sm:$0xff] %v240
                %v242 = vld [vmem:[%s226 + $0x70] sm:$0xff]
                %243 = vst [vmem:[%s227 + $0x38] sm:$0xff] %v242
              $region53: #{_forward_impl.1} parent=47 // loop_footer
                %s225 = sadd.s32 1, %s221
              $region54: #{_forward_impl.1} parent=47 // loop_footer_branch
                %220 = sbr.rel target = $region50
              $region55: #{_forward_impl.1} parent=47 // loop_exit
                _
            $region48: #{_forward_impl.1} parent=39 // pred_fallthru
              _
          $region40: #{_forward_impl.1} parent=35 // pred_fallthru
            _
          %272 = vnop
        $region36: #{_forward_impl.1} parent=31 // pred_fallthru
          _
      $region32: #{_forward_impl.1} parent=5 // pred_fallthru
        _
      %p273 = scmp.le.s32.totalorder 1, %s11
      %p274 = scmp.lt.s32.totalorder %s11, 3
      %p275 = pnand %p273, %p274
      %p276 = pneg %p275
      // Predicated region
      $region71: #{_forward_impl.1} parent=5 // pred_check
        _
      $region72: #{_forward_impl.1} parent=5 // pred_check_branch
        %278 = sbr.rel (%p275) target = $region74
      $region73: #{_forward_impl.1} parent=5 // pred_region
        %s279 = ssub.s32 %s11, 1
        %s280 = sand.u32 %s64, 1
        %s281 = sand.u32 %s64, 1
        %s282 = smul.addr %s281, 64
        %s283 = scalar_lea.vmem [#allocation3], %s282
        // Predicated region
        $region75: #{_forward_impl.1} parent=73 // pred_check
          %p284 = pneg %p77
        $region76: #{_forward_impl.1} parent=73 // pred_check_branch
          %286 = sbr.rel (%p284) target = $region78
        $region77: #{_forward_impl.1} parent=73 // pred_region
          _
        $region78: #{_forward_impl.1} parent=73 // pred_fallthru
          _
        %p287 = scmp.lt.s32.totalorder %s20, 0
        %s288 = scalar_select %p287, %s20, 0
        %s289 = smul.addr %s288, 8
        %s290 = scalar_lea.vmem %s0, %s289
        %p291 = pneg %p49
        %p292 = pneg %p46
        %s293 = sand.u32 %s64, 1
        %s294 = sand.u32 %s64, 1
        %s295 = smul.addr %s294, 64
        %s296 = scalar_lea.vmem [#allocation3], %s295
        %p297 = pneg %p77
        %p298 = pneg %p74
        %p299 = pneg %p98
        %p300 = pneg %p95
        %p301 = pneg %p119
        %p302 = pneg %p116
        %p303 = pneg %p140
        %p304 = pneg %p137
        %p305 = pneg %p166
        %p306 = pneg %p163
        %p307 = scmp.lt.s32.totalorder %s20, 0
        %s308 = scalar_select %p307, %s20, 0
        %s309 = smul.addr %s308, 8
        %s310 = scalar_lea.vmem %s5, %s309
        %p311 = scmp.lt.s32.totalorder %s20, 0
        %s312 = scalar_select %p311, %s20, 0
        %s313 = smul.addr %s312, 8
        %s314 = scalar_lea.vmem %s0, %s313
        %s315 = smul.u32 8, %s20
        %p316 = scmp.lt.s32.totalorder %s20, 0
        %s317 = scalar_select %p316, %s20, 0
        %s318 = smul.addr %s317, 8
        %s319 = scalar_lea.vmem %s5, %s318
        %p320 = scmp.eq.s32.totalorder %s21, 0
        // Predicated region
        $region79: #{_forward_impl.1} parent=73 // pred_check
          %p321 = pneg %p320
        $region80: #{_forward_impl.1} parent=73 // pred_check_branch
          %323 = sbr.rel (%p321) target = $region82
        $region81: #{_forward_impl.1} parent=73 // pred_region
          %vm324 = vcmask 261120
          %325 = vst.msk [vmem:[#allocation2] sm:$0xff] %vm324, 0.0
        $region82: #{_forward_impl.1} parent=73 // pred_fallthru
          _
        %v326 = vld [vmem:[#allocation2] sm:$0xff]
        %v327 = vld [vmem:[%s283] sm:$0xff]
        %v328 = vld [vmem:[%s283 + $0x8] sm:$0xff]
        %v329 = vld [vmem:[%s283 + $0x10] sm:$0xff]
        %v330 = vld [vmem:[%s283 + $0x18] sm:$0xff]
        %v331 = vld [vmem:[%s283 + $0x20] sm:$0xff]
        %v332 = vld [vmem:[%s283 + $0x28] sm:$0xff]
        %v333 = vld [vmem:[%s283 + $0x30] sm:$0xff]
        %v334 = vld [vmem:[%s283 + $0x38] sm:$0xff]
        %vm335 = vcmask 261120
        %v336 = vsel %vm335, %v327, 0.0
        %v337 = vrot.slane %v336, 4
        %v338 = vadd.f32 %v336, %v337
        %v339 = vrot.slane %v338, 2
        %v340 = vadd.f32 %v338, %v339
        %v341 = vrot.slane %v340, 1
        %v342 = vadd.f32 %v340, %v341
        %v343 = vsel %vm335, %v328, 0.0
        %v344 = vrot.slane %v343, 4
        %v345 = vadd.f32 %v343, %v344
        %v346 = vrot.slane %v345, 2
        %v347 = vadd.f32 %v345, %v346
        %v348 = vrot.slane %v347, 1
        %v349 = vadd.f32 %v347, %v348
        %v350 = vsel %vm335, %v329, 0.0
        %v351 = vrot.slane %v350, 4
        %v352 = vadd.f32 %v350, %v351
        %v353 = vrot.slane %v352, 2
        %v354 = vadd.f32 %v352, %v353
        %v355 = vrot.slane %v354, 1
        %v356 = vadd.f32 %v354, %v355
        %v357 = vsel %vm335, %v330, 0.0
        %v358 = vrot.slane %v357, 4
        %v359 = vadd.f32 %v357, %v358
        %v360 = vrot.slane %v359, 2
        %v361 = vadd.f32 %v359, %v360
        %v362 = vrot.slane %v361, 1
        %v363 = vadd.f32 %v361, %v362
        %v364 = vsel %vm335, %v331, 0.0
        %v365 = vrot.slane %v364, 4
        %v366 = vadd.f32 %v364, %v365
        %v367 = vrot.slane %v366, 2
        %v368 = vadd.f32 %v366, %v367
        %v369 = vrot.slane %v368, 1
        %v370 = vadd.f32 %v368, %v369
        %v371 = vsel %vm335, %v332, 0.0
        %v372 = vrot.slane %v371, 4
        %v373 = vadd.f32 %v371, %v372
        %v374 = vrot.slane %v373, 2
        %v375 = vadd.f32 %v373, %v374
        %v376 = vrot.slane %v375, 1
        %v377 = vadd.f32 %v375, %v376
        %v378 = vsel %vm335, %v333, 0.0
        %v379 = vrot.slane %v378, 4
        %v380 = vadd.f32 %v378, %v379
        %v381 = vrot.slane %v380, 2
        %v382 = vadd.f32 %v380, %v381
        %v383 = vrot.slane %v382, 1
        %v384 = vadd.f32 %v382, %v383
        %v385 = vsel %vm335, %v334, 0.0
        %v386 = vrot.slane %v385, 4
        %v387 = vadd.f32 %v385, %v386
        %v388 = vrot.slane %v387, 2
        %v389 = vadd.f32 %v387, %v388
        %v390 = vrot.slane %v389, 1
        %v391 = vadd.f32 %v389, %v390
        %vm400 = vcmask 1041409
        %v401 = vsel %vm400, %v349, %v342
        %vm402 = vcmask 1042434
        %v403 = vsel %vm402, %v356, %v401
        %vm404 = vcmask 1043459
        %v405 = vsel %vm404, %v363, %v403
        %vm406 = vcmask 1044484
        %v407 = vsel %vm406, %v370, %v405
        %vm408 = vcmask 1045509
        %v409 = vsel %vm408, %v377, %v407
        %vm410 = vcmask 1046534
        %v411 = vsel %vm410, %v384, %v409
        %vm412 = vcmask 1047559
        %v413 = vsel %vm412, %v391, %v411
        %v415 = vadd.f32 %v326, %v413
        %416 = vst.msk [vmem:[#allocation2] sm:$0xff] %vm335, %v415
        %p417 = scmp.eq.s32.totalorder %s21, 1
        // Predicated region
        $region83: #{_forward_impl.1} parent=73 // pred_check
          %p418 = pneg %p417
        $region84: #{_forward_impl.1} parent=73 // pred_check_branch
          %420 = sbr.rel (%p418) target = $region86
        $region85: #{_forward_impl.1} parent=73 // pred_region
          %v421 = vld [vmem:[%s314] sm:$0xff]
          %v422 = vld [vmem:[%s2] sm:$0xff]
          %v423 = vld [vmem:[%s2 + $0x8] sm:$0xff]
          %v424 = vld [vmem:[%s2 + $0x10] sm:$0xff]
          %v425 = vld [vmem:[%s2 + $0x18] sm:$0xff]
          %v426 = vld [vmem:[%s2 + $0x20] sm:$0xff]
          %v427 = vld [vmem:[%s2 + $0x28] sm:$0xff]
          %v428 = vld [vmem:[%s2 + $0x30] sm:$0xff]
          %v429 = vld [vmem:[%s2 + $0x38] sm:$0xff]
          %v430 = vld [vmem:[%s2 + $0x40] sm:$0xff]
          %v431 = vld [vmem:[%s2 + $0x48] sm:$0xff]
          %v432 = vld [vmem:[%s2 + $0x50] sm:$0xff]
          %v433 = vld [vmem:[%s2 + $0x58] sm:$0xff]
          %v434 = vld [vmem:[%s2 + $0x60] sm:$0xff]
          %v435 = vld [vmem:[%s2 + $0x68] sm:$0xff]
          %v436 = vld [vmem:[%s2 + $0x70] sm:$0xff]
          %v437 = vld [vmem:[%s2 + $0x78] sm:$0xff]
          %v438 = vld [vmem:[#allocation2] sm:$0xff]
          %v439 = vmul.f32 %v438, 0.0625
          %v440 = vld [vmem:[%s3] sm:$0xff]
          %v441 = vld [vmem:[%s3 + $0x8] sm:$0xff]
          %v442 = vld [vmem:[%s3 + $0x10] sm:$0xff]
          %v443 = vld [vmem:[%s3 + $0x18] sm:$0xff]
          %v445 = vsel %vm335, %v439, 0
          %447 = vmatprep.subr.mxu0 0.0
          %448 = vmatpush1.msra.mxu0 %v440
          %449 = vmatprep.subr.mxu0 0.0
          %450 = vmatpush1.msra.mxu0 %v441
          %451 = vmatprep.subr.mxu0 0.0
          %452 = vmatpush1.msra.mxu0 %v442
          %453 = vmatprep.subr.mxu0 0.0
          %454 = vmatpush1.msra.mxu0 %v443
          %455 = vmatprep.subr.mxu0 0.0
          %456 = vmatpush1.msra.mxu0 0.0
          %457 = vmatprep.subr.mxu0 0.0
          %458 = vmatpush1.msra.mxu0 0.0
          %459 = vmatprep.subr.mxu0 0.0
          %460 = vmatpush1.msra.mxu0 0.0
          %461 = vmatprep.subr.mxu0 0.0
          %462 = vmatpush1.msra.mxu0 0.0
          %463 = vmatprep.subr.mxu0 0.0
          %464 = vmatpush1.msra.mxu0 0.0
          %465 = vmatprep.subr.mxu0 0.0
          %466 = vmatpush1.msra.mxu0 0.0
          %467 = vmatprep.subr.mxu0 0.0
          %468 = vmatpush1.msra.mxu0 0.0
          %469 = vmatprep.subr.mxu0 0.0
          %470 = vmatpush1.msra.mxu0 0.0
          %471 = vmatprep.subr.mxu0 0.0
          %472 = vmatpush1.msra.mxu0 0.0
          %473 = vmatprep.subr.mxu0 0.0
          %474 = vmatpush1.msra.mxu0 0.0
          %475 = vmatprep.subr.mxu0 0.0
          %476 = vmatpush1.msra.mxu0 0.0
          %477 = vmatprep.subr.mxu0 0.0
          %478 = vmatpush1.msra.mxu0 0.0
          %479 = vmatprep.subr.mxu0 0.0
          %480 = vmatpush1.msra.mxu0 0.0
          %481 = vmatprep.subr.mxu0 0.0
          %482 = vmatpush1.msra.mxu0 0.0
          %483 = vmatprep.subr.mxu0 0.0
          %484 = vmatpush1.msra.mxu0 0.0
          %485 = vmatprep.subr.mxu0 0.0
          %486 = vmatpush1.msra.mxu0 0.0
          %487 = vmatprep.subr.mxu0 0.0
          %488 = vmatpush1.msra.mxu0 0.0
          %489 = vmatprep.subr.mxu0 0.0
          %490 = vmatpush1.msra.mxu0 0.0
          %491 = vmatprep.subr.mxu0 0.0
          %492 = vmatpush1.msra.mxu0 0.0
          %493 = vmatprep.subr.mxu0 0.0
          %494 = vmatpush1.msra.mxu0 0.0
          %495 = vmatprep.subr.mxu0 0.0
          %496 = vmatpush1.msra.mxu0 0.0
          %497 = vmatprep.subr.mxu0 0.0
          %498 = vmatpush1.msra.mxu0 0.0
          %499 = vmatprep.subr.mxu0 0.0
          %500 = vmatpush1.msra.mxu0 0.0
          %501 = vmatprep.subr.mxu0 0.0
          %502 = vmatpush1.msra.mxu0 0.0
          %503 = vmatprep.subr.mxu0 0.0
          %504 = vmatpush1.msra.mxu0 0.0
          %505 = vmatprep.subr.mxu0 0.0
          %506 = vmatpush1.msra.mxu0 0.0
          %507 = vmatprep.subr.mxu0 0.0
          %508 = vmatpush1.msra.mxu0 0.0
          %509 = vmatprep.subr.mxu0 0.0
          %510 = vmatpush1.msra.mxu0 0.0
          %511 = vmatprep.mubr.f32.mxu0 0.0
          %512 = vmatmul.mubr.f32.gmra.mrb[0].mxu0 %v445
          %v513 = vpop.f32.mrb[0].mxu0
          %v514 = vadd.f32 0.0, %v513
          %v515 = vpop.f32.mrb[0].mxu0
          %516 = vdwg.mxu0
          %517 = vmatprep.subr.mxu0 0.0
          %518 = vmatpush1.msra.mxu0 %v422
          %519 = vmatprep.subr.mxu0 0.0
          %520 = vmatpush1.msra.mxu0 %v423
          %521 = vmatprep.subr.mxu0 0.0
          %522 = vmatpush1.msra.mxu0 %v424
          %523 = vmatprep.subr.mxu0 0.0
          %524 = vmatpush1.msra.mxu0 %v425
          %525 = vmatprep.subr.mxu0 0.0
          %526 = vmatpush1.msra.mxu0 %v426
          %527 = vmatprep.subr.mxu0 0.0
          %528 = vmatpush1.msra.mxu0 %v427
          %529 = vmatprep.subr.mxu0 0.0
          %530 = vmatpush1.msra.mxu0 %v428
          %531 = vmatprep.subr.mxu0 0.0
          %532 = vmatpush1.msra.mxu0 %v429
          %533 = vmatprep.subr.mxu0 0.0
          %534 = vmatpush1.msra.mxu0 %v430
          %535 = vmatprep.subr.mxu0 0.0
          %536 = vmatpush1.msra.mxu0 %v431
          %537 = vmatprep.subr.mxu0 0.0
          %538 = vmatpush1.msra.mxu0 %v432
          %539 = vmatprep.subr.mxu0 0.0
          %540 = vmatpush1.msra.mxu0 %v433
          %541 = vmatprep.subr.mxu0 0.0
          %542 = vmatpush1.msra.mxu0 %v434
          %543 = vmatprep.subr.mxu0 0.0
          %544 = vmatpush1.msra.mxu0 %v435
          %545 = vmatprep.subr.mxu0 0.0
          %546 = vmatpush1.msra.mxu0 %v436
          %547 = vmatprep.subr.mxu0 0.0
          %548 = vmatpush1.msra.mxu0 %v437
          %549 = vmatprep.subr.mxu0 0.0
          %550 = vmatpush1.msra.mxu0 0.0
          %551 = vmatprep.subr.mxu0 0.0
          %552 = vmatpush1.msra.mxu0 0.0
          %553 = vmatprep.subr.mxu0 0.0
          %554 = vmatpush1.msra.mxu0 0.0
          %555 = vmatprep.subr.mxu0 0.0
          %556 = vmatpush1.msra.mxu0 0.0
          %557 = vmatprep.subr.mxu0 0.0
          %558 = vmatpush1.msra.mxu0 0.0
          %559 = vmatprep.subr.mxu0 0.0
          %560 = vmatpush1.msra.mxu0 0.0
          %561 = vmatprep.subr.mxu0 0.0
          %562 = vmatpush1.msra.mxu0 0.0
          %563 = vmatprep.subr.mxu0 0.0
          %564 = vmatpush1.msra.mxu0 0.0
          %565 = vmatprep.subr.mxu0 0.0
          %566 = vmatpush1.msra.mxu0 0.0
          %567 = vmatprep.subr.mxu0 0.0
          %568 = vmatpush1.msra.mxu0 0.0
          %569 = vmatprep.subr.mxu0 0.0
          %570 = vmatpush1.msra.mxu0 0.0
          %571 = vmatprep.subr.mxu0 0.0
          %572 = vmatpush1.msra.mxu0 0.0
          %573 = vmatprep.subr.mxu0 0.0
          %574 = vmatpush1.msra.mxu0 0.0
          %575 = vmatprep.subr.mxu0 0.0
          %576 = vmatpush1.msra.mxu0 0.0
          %577 = vmatprep.subr.mxu0 0.0
          %578 = vmatpush1.msra.mxu0 0.0
          %579 = vmatprep.subr.mxu0 0.0
          %580 = vmatpush1.msra.mxu0 0.0
          %581 = vmatprep.mubr.f32.mxu0 0.0
          %582 = vmatmul.mubr.f32.gmra.mrb[0].mxu0 %v421
          %v583 = vpop.f32.mrb[0].mxu0
          %v584 = vadd.f32 %v514, %v583
          %v585 = vpop.f32.mrb[0].mxu0
          %586 = vdwg.mxu0
          %v587 = vld [vmem:[%s4] sm:$0x1]
          %v589 = vlaneseq
          %v590 = vshrl.u32 %v589, 7
          %v591 = vsub.s32 0, %v590
          %v592 = vrot.slane %v587, %v591
          %v594 = vadd.f32 %v584, %v592
          %595 = vst [vmem:[%s319] sm:$0xff] %v594
        $region86: #{_forward_impl.1} parent=73 // pred_fallthru
          _
        %p596 = scmp.lt.s32.totalorder %s20, 0
        %s597 = scalar_select %p596, %s20, 0
        %s598 = smul.addr %s597, 8
        %s599 = scalar_lea.vmem %s5, %s598
        // Predicated region
        $region87: #{_forward_impl.1} parent=73 // pred_check
          %p600 = pneg %p163
        $region88: #{_forward_impl.1} parent=73 // pred_check_branch
          %602 = sbr.rel (%p600) target = $region90
        $region89: #{_forward_impl.1} parent=73 // pred_region
          _
        $region90: #{_forward_impl.1} parent=73 // pred_fallthru
          _
        // Predicated region
        $region91: #{_forward_impl.1} parent=73 // pred_check
          %p603 = pneg %p163
        $region92: #{_forward_impl.1} parent=73 // pred_check_branch
          %605 = sbr.rel (%p603) target = $region94
        $region93: #{_forward_impl.1} parent=73 // pred_region
          %p606 = scmp.lt.s32.totalorder %s20, 0
          %s607 = scalar_select %p606, %s20, 0
          %s608 = smul.addr %s607, 8
          %s609 = scalar_lea.vmem %s5, %s608
        $region94: #{_forward_impl.1} parent=73 // pred_fallthru
          _
      $region74: #{_forward_impl.1} parent=5 // pred_fallthru
        _
      %p610 = scmp.le.s32.totalorder 2, %s11
      // Predicated region
      $region95: #{_forward_impl.1} parent=5 // pred_check
        %p611 = pneg %p610
      $region96: #{_forward_impl.1} parent=5 // pred_check_branch
        %613 = sbr.rel (%p611) target = $region98
      $region97: #{_forward_impl.1} parent=5 // pred_region
        %s614 = ssub.s32 %s11, 2
      $region98: #{_forward_impl.1} parent=5 // pred_fallthru
        _
    $region6: #{_forward_impl.1} parent=1 // loop_footer
      %s15 = sadd.s32 1, %s11
    $region7: #{_forward_impl.1} parent=1 // loop_footer_branch
      %10 = sbr.rel target = $region3
    $region8: #{_forward_impl.1} parent=1 // loop_exit
      _

</llo_original>
